<compile_context>
chip_gen: v7x
topology: tpu7x:2x2x1
jax: 0.10.0
libtpu: 0.0.40
codegen_flags: <defaults>
</compile_context>

<pallas_src>
import functools
import math

import jax
import jax.numpy as jnp
from jax import lax
from jax.experimental import pallas as pl
from jax.experimental.pallas import tpu as pltpu


def _mhsa_kernel(x_ref, wqkv_ref, bqkv_ref, wo_ref, bo_ref, o_ref, acc_ref, *,
                 n_heads, dq, dv, tq, num_q_tiles, apply_out_proj,
                 compute_dtype):
    """One (batch, q-tile, head) grid step.

    x_ref:    (S, in_dim)         activations (compute dtype)
    wqkv_ref: (in_dim, 2*dq+dv)   per-head fused [Wq*scale | Wk | Wv]
    bqkv_ref: (1, 2*dq+dv)        per-head fused bias (f32, bq pre-scaled)
    wo_ref:   (dv, v_dim)         per-head slice of the output projection
    bo_ref:   (1, v_dim)          output projection bias (f32)
    o_ref:    (tq, v_dim)         output tile (written on the last head)
    acc_ref:  (tq, v_dim) f32     output-projection accumulator across heads
    """
    h = pl.program_id(2)

    x = x_ref[...]

    # Fused QKV projection for this head: one MXU matmul, f32 accumulation.
    qkv = jnp.dot(x, wqkv_ref[...], preferred_element_type=jnp.float32)
    qkv = qkv + bqkv_ref[...]
    q = qkv[:, :dq]              # 1/sqrt(dq) already folded into Wq / bq
    k = qkv[:, dq:2 * dq]
    v = qkv[:, 2 * dq:]

    if num_q_tiles == 1:
        q_t = q
    else:
        qi = pl.program_id(1)
        start = pl.multiple_of(qi * tq, tq)
        q_t = lax.dynamic_slice_in_dim(q, start, tq, axis=0)

    # scores = q_t @ k.T without materializing the transpose (contract last axes).
    s = lax.dot_general(q_t.astype(compute_dtype), k.astype(compute_dtype),
                        dimension_numbers=(((1,), (1,)), ((), ())),
                        preferred_element_type=jnp.float32)        # (tq, S)
    # TODO(synk): optional `mask` (masked_fill(mask == 0, -1000.0)) and dropout
    # are not implemented (both default to None in the PyTorch module).

    # Numerically-stable softmax in f32; EUP reciprocal instead of a VALU divide.
    s = s - jnp.max(s, axis=-1, keepdims=True)
    e = jnp.exp(s)
    p = e * pl.reciprocal(jnp.sum(e, axis=-1, keepdims=True), approx=True)

    head_out = jnp.dot(p.astype(compute_dtype), v.astype(compute_dtype),
                       preferred_element_type=jnp.float32)          # (tq, dv)

    if apply_out_proj:
        @pl.when(h == 0)
        def _init():
            acc_ref[...] = jnp.broadcast_to(
                bo_ref[...], acc_ref.shape).astype(jnp.float32)

        acc_ref[...] += jnp.dot(head_out.astype(compute_dtype), wo_ref[...],
                                preferred_element_type=jnp.float32)

        @pl.when(h == n_heads - 1)
        def _store():
            o_ref[...] = acc_ref[...].astype(o_ref.dtype)
    else:
        # Single head: the module skips the output projection entirely.
        o_ref[...] = head_out.astype(o_ref.dtype)


def multi_head_self_attention(x, params, n_heads, qk_dim,
                              compute_dtype=jnp.bfloat16):
    """x: (B, S, in_dim). params: torch-convention weights (out, in) / (out,)."""
    B, S, in_dim = x.shape
    v_dim = in_dim
    dq = qk_dim // n_heads
    dv = v_dim // n_heads
    tot = 2 * dq + dv
    out_dtype = x.dtype
    apply_out_proj = n_heads > 1
    scale = 1.0 / math.sqrt(dq)

    # Query-row tiling (degenerate for short sequences; bounds VMEM for long S).
    tq = 128 if (S > 128 and S % 128 == 0) else S
    num_q_tiles = S // tq

    f32 = jnp.float32

    def split_heads_w(w_t, d):  # (in_dim, H*d) -> (H, in_dim, d)
        return w_t.reshape(in_dim, n_heads, d).transpose(1, 0, 2)

    # Fused per-head [Wq*scale | Wk | Wv], pre-transposed to (in, out) layout.
    wqkv = jnp.concatenate(
        [split_heads_w(params["wq"].astype(f32).T * scale, dq),
         split_heads_w(params["wk"].astype(f32).T, dq),
         split_heads_w(params["wv"].astype(f32).T, dv)],
        axis=-1).astype(compute_dtype)                          # (H, in_dim, tot)
    bqkv = jnp.concatenate(
        [params["bq"].astype(f32).reshape(n_heads, dq) * scale,
         params["bk"].astype(f32).reshape(n_heads, dq),
         params["bv"].astype(f32).reshape(n_heads, dv)],
        axis=-1).reshape(n_heads, 1, tot)                        # (H, 1, tot) f32

    if apply_out_proj:
        wo = params["wo"].astype(f32).T.reshape(
            n_heads, dv, v_dim).astype(compute_dtype)            # (H, dv, v_dim)
        bo = params["bo"].astype(f32).reshape(1, v_dim)
    else:
        wo = jnp.zeros((1, dv, v_dim), compute_dtype)            # unused dummies
        bo = jnp.zeros((1, v_dim), f32)

    x_c = x.astype(compute_dtype)

    # Advisory cost estimate for XLA scheduling.
    flops = int(2 * B * S * in_dim * (2 * qk_dim + v_dim)
                + 2 * B * n_heads * S * S * (dq + dv)
                + (2 * B * S * v_dim * v_dim if apply_out_proj else 0))
    transc = int(B * n_heads * S * S)
    c_item = jnp.dtype(compute_dtype).itemsize
    bytes_accessed = int(B * S * in_dim * c_item
                         + B * S * v_dim * jnp.dtype(out_dtype).itemsize
                         + wqkv.size * c_item + bqkv.size * 4
                         + wo.size * c_item + bo.size * 4)

    kernel = functools.partial(
        _mhsa_kernel, n_heads=n_heads, dq=dq, dv=dv, tq=tq,
        num_q_tiles=num_q_tiles, apply_out_proj=apply_out_proj,
        compute_dtype=compute_dtype)

    return pl.pallas_call(
        kernel,
        out_shape=jax.ShapeDtypeStruct((B, S, v_dim), out_dtype),
        grid_spec=pltpu.PrefetchScalarGridSpec(
            num_scalar_prefetch=0,
            grid=(B, num_q_tiles, n_heads),
            in_specs=[
                pl.BlockSpec((None, S, in_dim), lambda b, qi, h: (b, 0, 0)),   # x
                pl.BlockSpec((None, in_dim, tot), lambda b, qi, h: (h, 0, 0)), # wqkv
                pl.BlockSpec((None, 1, tot), lambda b, qi, h: (h, 0, 0)),      # bqkv
                pl.BlockSpec((None, dv, v_dim), lambda b, qi, h: (h, 0, 0)),   # wo
                pl.BlockSpec((1, v_dim), lambda b, qi, h: (0, 0)),             # bo
            ],
            out_specs=pl.BlockSpec((None, tq, v_dim), lambda b, qi, h: (b, qi, 0)),
            scratch_shapes=[pltpu.VMEM((tq, v_dim), jnp.float32)],
        ),
        compiler_params=pltpu.CompilerParams(
            dimension_semantics=("parallel", "parallel", "arbitrary"),
            vmem_limit_bytes=32 * 1024 * 1024),
        cost_estimate=pl.CostEstimate(
            flops=flops, transcendentals=transc, bytes_accessed=bytes_accessed),
    )(x_c, wqkv, bqkv, wo, bo)


def _reference(x, params, n_heads, qk_dim):
    """Pure-JAX f32 reference mirroring the PyTorch forward exactly."""
    B, S, in_dim = x.shape
    v_dim = in_dim
    dq = qk_dim // n_heads
    dv = v_dim // n_heads
    q = x @ params["wq"].T + params["bq"]
    k = x @ params["wk"].T + params["bk"]
    v = x @ params["wv"].T + params["bv"]
    q = q.reshape(B, S, n_heads, dq).transpose(0, 2, 1, 3)
    k = k.reshape(B, S, n_heads, dq).transpose(0, 2, 1, 3)
    v = v.reshape(B, S, n_heads, dv).transpose(0, 2, 1, 3)
    scores = jnp.einsum("bhqd,bhkd->bhqk", q, k) / jnp.sqrt(jnp.float32(dq))
    scores = jax.nn.softmax(scores, axis=-1)
    out = jnp.einsum("bhqk,bhkd->bhqd", scores, v)
    out = out.transpose(0, 2, 1, 3).reshape(B, S, v_dim)
    if n_heads > 1:
        out = out @ params["wo"].T + params["bo"]
    return out


if __name__ == "__main__":
    B, S, in_dim = 2, 8, 32
    n_heads, qk_dim = 4, 32
    v_dim = in_dim

    key = jax.random.PRNGKey(0)
    keys = jax.random.split(key, 9)
    x = jax.random.normal(keys[0], (B, S, in_dim), dtype=jnp.float32)

    def init_linear(kw, kb, out_f, in_f):
        bound = 1.0 / math.sqrt(in_f)
        w = jax.random.uniform(kw, (out_f, in_f), jnp.float32, -bound, bound)
        b = jax.random.uniform(kb, (out_f,), jnp.float32, -bound, bound)
        return w, b

    wq, bq = init_linear(keys[1], keys[2], qk_dim, in_dim)
    wk, bk = init_linear(keys[3], keys[4], qk_dim, in_dim)
    wv, bv = init_linear(keys[5], keys[6], v_dim, in_dim)
    wo, bo = init_linear(keys[7], keys[8], in_dim, in_dim)
    params = dict(wq=wq, bq=bq, wk=wk, bk=bk, wv=wv, bv=bv, wo=wo, bo=bo)

    ref = _reference(x, params, n_heads, qk_dim)

    # f32 compute path (module-precision; only the EUP approx reciprocal differs).
    out_f32 = jax.block_until_ready(
        multi_head_self_attention(x, params, n_heads, qk_dim,
                                  compute_dtype=jnp.float32))
    assert out_f32.shape == (B, S, v_dim)
    assert jnp.allclose(out_f32, ref, atol=5e-3, rtol=5e-3), (
        float(jnp.max(jnp.abs(out_f32 - ref))))

    # Default bf16 MXU path (f32 accumulation) with relaxed tolerance.
    out_bf16 = jax.block_until_ready(
        multi_head_self_attention(x, params, n_heads, qk_dim,
                                  compute_dtype=jnp.bfloat16))
    assert jnp.allclose(out_bf16, ref, atol=5e-2, rtol=5e-2), (
        float(jnp.max(jnp.abs(out_bf16 - ref))))

    # Single-head path (module skips the output projection).
    ref1 = _reference(x, params, 1, qk_dim)
    out1 = jax.block_until_ready(
        multi_head_self_attention(x, params, 1, qk_dim,
                                  compute_dtype=jnp.float32))
    assert jnp.allclose(out1, ref1, atol=5e-3, rtol=5e-3), (
        float(jnp.max(jnp.abs(out1 - ref1))))

    print("KERNEL_OK")
</pallas_src>

<mosaic_0001>
module attributes {stable_mosaic.version = 11 : i64} {
  func.func @_mhsa_kernel(%arg0: i32, %arg1: i32, %arg2: i32, %arg3: memref<1x8x32xf32, #tpu.memory_space<vmem>>, %arg4: memref<1x32x24xf32, #tpu.memory_space<vmem>>, %arg5: memref<1x1x24xf32, #tpu.memory_space<vmem>>, %arg6: memref<1x8x32xf32, #tpu.memory_space<vmem>>, %arg7: memref<1x32xf32, #tpu.memory_space<vmem>>, %arg8: memref<1x8x32xf32, #tpu.memory_space<vmem>>, %arg9: memref<8x32xf32, #tpu.memory_space<vmem>>) attributes {dimension_semantics = [#tpu.dimension_semantics<parallel>, #tpu.dimension_semantics<parallel>, #tpu.dimension_semantics<arbitrary>], iteration_bounds = array<i64: 2, 1, 4>, scalar_prefetch = 0 : i64, scratch_operands = 1 : i64, tpu.core_type = #tpu.core_type<tc>, window_params = [{transform_indices = @transform_0, window_bounds = array<i64: 1, 8, 32>}, {transform_indices = @transform_1, window_bounds = array<i64: 1, 32, 24>}, {transform_indices = @transform_2, window_bounds = array<i64: 1, 1, 24>}, {transform_indices = @transform_3, window_bounds = array<i64: 1, 8, 32>}, {pipeline_mode = #tpu.pipeline_mode<synchronous>, transform_indices = @transform_4, window_bounds = array<i64: 1, 32>}, {transform_indices = @transform_5, window_bounds = array<i64: 1, 8, 32>}]} {
    %c0 = arith.constant 0 : index
    %c0_0 = arith.constant 0 : index
    %c0_1 = arith.constant 0 : index
    %0 = vector.load %arg3[%c0, %c0_0, %c0_1] : memref<1x8x32xf32, #tpu.memory_space<vmem>>, vector<1x8x32xf32>
    %1 = vector.shape_cast %0 : vector<1x8x32xf32> to vector<8x32xf32>
    %c0_2 = arith.constant 0 : index
    %c0_3 = arith.constant 0 : index
    %c0_4 = arith.constant 0 : index
    %2 = vector.load %arg4[%c0_2, %c0_3, %c0_4] : memref<1x32x24xf32, #tpu.memory_space<vmem>>, vector<1x32x24xf32>
    %3 = vector.shape_cast %2 : vector<1x32x24xf32> to vector<32x24xf32>
    %cst = arith.constant dense<0.000000e+00> : vector<8x24xf32>
    %4 = tpu.matmul %1, %3, %cst {dimension_numbers = #tpu.dot_dimension_numbers<[1], [0], [0], [1], [0, 0, 1, 1], [], []>} : vector<8x32xf32>, vector<32x24xf32>, vector<8x24xf32> -> vector<8x24xf32>
    %c0_5 = arith.constant 0 : index
    %c0_6 = arith.constant 0 : index
    %c0_7 = arith.constant 0 : index
    %5 = vector.load %arg5[%c0_5, %c0_6, %c0_7] : memref<1x1x24xf32, #tpu.memory_space<vmem>>, vector<1x1x24xf32>
    %6 = vector.shape_cast %5 : vector<1x1x24xf32> to vector<1x24xf32>
    %7 = vector.broadcast %6 : vector<1x24xf32> to vector<8x24xf32>
    %8 = arith.addf %4, %7 : vector<8x24xf32>
    %9 = vector.extract_strided_slice %8 {offsets = [0, 0], sizes = [8, 8], strides = [1, 1]} : vector<8x24xf32> to vector<8x8xf32>
    %10 = vector.extract_strided_slice %8 {offsets = [0, 8], sizes = [8, 8], strides = [1, 1]} : vector<8x24xf32> to vector<8x8xf32>
    %11 = vector.extract_strided_slice %8 {offsets = [0, 16], sizes = [8, 8], strides = [1, 1]} : vector<8x24xf32> to vector<8x8xf32>
    %cst_8 = arith.constant dense<0.000000e+00> : vector<8x8xf32>
    %12 = tpu.matmul %9, %10, %cst_8 {dimension_numbers = #tpu.dot_dimension_numbers<[1], [1], [0], [0], [0, 0, 1, 0], [], []>} : vector<8x8xf32>, vector<8x8xf32>, vector<8x8xf32> -> vector<8x8xf32>
    %cst_9 = arith.constant dense<0xFF800000> : vector<8xf32>
    %13 = vector.multi_reduction <maximumf>, %12, %cst_9 [1] : vector<8x8xf32> to vector<8xf32>
    %14 = vector.shape_cast %13 : vector<8xf32> to vector<8x1xf32>
    %15 = vector.broadcast %14 : vector<8x1xf32> to vector<8x8xf32>
    %16 = arith.subf %12, %15 : vector<8x8xf32>
    %17 = math.exp %16 : vector<8x8xf32>
    %cst_10 = arith.constant dense<0.000000e+00> : vector<8xf32>
    %18 = vector.multi_reduction <add>, %17, %cst_10 [1] : vector<8x8xf32> to vector<8xf32>
    %19 = vector.shape_cast %18 : vector<8xf32> to vector<8x1xf32>
    %20 = tpu.reciprocal %19 {approx = true} : vector<8x1xf32> -> vector<8x1xf32>
    %21 = vector.broadcast %20 : vector<8x1xf32> to vector<8x8xf32>
    %22 = arith.mulf %17, %21 : vector<8x8xf32>
    %cst_11 = arith.constant dense<0.000000e+00> : vector<8x8xf32>
    %23 = tpu.matmul %22, %11, %cst_11 {dimension_numbers = #tpu.dot_dimension_numbers<[1], [0], [0], [1], [0, 0, 1, 1], [], []>} : vector<8x8xf32>, vector<8x8xf32>, vector<8x8xf32> -> vector<8x8xf32>
    %c0_i32 = arith.constant 0 : i32
    %24 = arith.cmpi eq, %arg2, %c0_i32 : i32
    %25 = arith.extui %24 : i1 to i32
    %c0_i32_12 = arith.constant 0 : i32
    %26 = arith.cmpi ne, %25, %c0_i32_12 : i32
    scf.if %26 {
      %c0_22 = arith.constant 0 : index
      %c0_23 = arith.constant 0 : index
      %36 = vector.load %arg7[%c0_22, %c0_23] : memref<1x32xf32, #tpu.memory_space<vmem>>, vector<1x32xf32>
      %37 = vector.shape_cast %36 : vector<1x32xf32> to vector<1x32xf32>
      %38 = vector.broadcast %37 : vector<1x32xf32> to vector<8x32xf32>
      %c0_24 = arith.constant 0 : index
      %c0_25 = arith.constant 0 : index
      %39 = vector.load %arg9[%c0_24, %c0_25] : memref<8x32xf32, #tpu.memory_space<vmem>>, vector<8x32xf32>
      tpu.vector_store %arg9[%c0_24, %c0_25], %38 {strides = array<i32>} : memref<8x32xf32, #tpu.memory_space<vmem>>, vector<8x32xf32>,
    } else {
    }
    %c0_13 = arith.constant 0 : index
    %c0_14 = arith.constant 0 : index
    %27 = vector.load %arg9[%c0_13, %c0_14] : memref<8x32xf32, #tpu.memory_space<vmem>>, vector<8x32xf32>
    %c0_15 = arith.constant 0 : index
    %c0_16 = arith.constant 0 : index
    %c0_17 = arith.constant 0 : index
    %28 = vector.load %arg6[%c0_15, %c0_16, %c0_17] : memref<1x8x32xf32, #tpu.memory_space<vmem>>, vector<1x8x32xf32>
    %29 = vector.shape_cast %28 : vector<1x8x32xf32> to vector<8x32xf32>
    %cst_18 = arith.constant dense<0.000000e+00> : vector<8x32xf32>
    %30 = tpu.matmul %23, %29, %cst_18 {dimension_numbers = #tpu.dot_dimension_numbers<[1], [0], [0], [1], [0, 0, 1, 1], [], []>} : vector<8x8xf32>, vector<8x32xf32>, vector<8x32xf32> -> vector<8x32xf32>
    %31 = arith.addf %27, %30 : vector<8x32xf32>
    %c0_19 = arith.constant 0 : index
    %c0_20 = arith.constant 0 : index
    %32 = vector.load %arg9[%c0_19, %c0_20] : memref<8x32xf32, #tpu.memory_space<vmem>>, vector<8x32xf32>
    tpu.vector_store %arg9[%c0_19, %c0_20], %31 {strides = array<i32>} : memref<8x32xf32, #tpu.memory_space<vmem>>, vector<8x32xf32>,
    %c3_i32 = arith.constant 3 : i32
    %33 = arith.cmpi eq, %arg2, %c3_i32 : i32
    %34 = arith.extui %33 : i1 to i32
    %c0_i32_21 = arith.constant 0 : i32
    %35 = arith.cmpi ne, %34, %c0_i32_21 : i32
    scf.if %35 {
      %c0_22 = arith.constant 0 : index
      %c0_23 = arith.constant 0 : index
      %36 = vector.load %arg9[%c0_22, %c0_23] : memref<8x32xf32, #tpu.memory_space<vmem>>, vector<8x32xf32>
      %c0_24 = arith.constant 0 : index
      %c0_25 = arith.constant 0 : index
      %c0_26 = arith.constant 0 : index
      %37 = vector.load %arg8[%c0_24, %c0_25, %c0_26] : memref<1x8x32xf32, #tpu.memory_space<vmem>>, vector<1x8x32xf32>
      %38 = vector.shape_cast %37 : vector<1x8x32xf32> to vector<8x32xf32>
      %39 = vector.shape_cast %36 : vector<8x32xf32> to vector<1x8x32xf32>
      tpu.vector_store %arg8[%c0_24, %c0_25, %c0_26], %39 {strides = array<i32>} : memref<1x8x32xf32, #tpu.memory_space<vmem>>, vector<1x8x32xf32>,
    } else {
    }
    return
  }
  func.func @transform_0(%arg0: i32, %arg1: i32, %arg2: i32) -> (i32, i32, i32) {
    %c0_i32 = arith.constant 0 : i32
    %c0_i32_0 = arith.constant 0 : i32
    %c0_i32_1 = arith.constant 0 : i32
    return %arg0, %c0_i32, %c0_i32_0 : i32, i32, i32
  }
  func.func @transform_1(%arg0: i32, %arg1: i32, %arg2: i32) -> (i32, i32, i32) {
    %c0_i32 = arith.constant 0 : i32
    %c0_i32_0 = arith.constant 0 : i32
    %c0_i32_1 = arith.constant 0 : i32
    return %arg2, %c0_i32, %c0_i32_0 : i32, i32, i32
  }
  func.func @transform_2(%arg0: i32, %arg1: i32, %arg2: i32) -> (i32, i32, i32) {
    %c0_i32 = arith.constant 0 : i32
    %c0_i32_0 = arith.constant 0 : i32
    %c0_i32_1 = arith.constant 0 : i32
    return %arg2, %c0_i32, %c0_i32_0 : i32, i32, i32
  }
  func.func @transform_3(%arg0: i32, %arg1: i32, %arg2: i32) -> (i32, i32, i32) {
    %c0_i32 = arith.constant 0 : i32
    %c0_i32_0 = arith.constant 0 : i32
    %c0_i32_1 = arith.constant 0 : i32
    return %arg2, %c0_i32, %c0_i32_0 : i32, i32, i32
  }
  func.func @transform_4(%arg0: i32, %arg1: i32, %arg2: i32) -> (i32, i32) {
    %c0_i32 = arith.constant 0 : i32
    %c0_i32_0 = arith.constant 0 : i32
    %c0_i32_1 = arith.constant 0 : i32
    return %c0_i32, %c0_i32_0 : i32, i32
  }
  func.func @transform_5(%arg0: i32, %arg1: i32, %arg2: i32) -> (i32, i32, i32) {
    %c0_i32 = arith.constant 0 : i32
    %c0_i32_0 = arith.constant 0 : i32
    return %arg0, %arg1, %c0_i32 : i32, i32, i32
  }
}

</mosaic_0001>

<llo_original>
// kernel: tpu_custom_call.1
$region0: #{tpu_custom_call.1}
  #allocation0 [shape = 'u32[]', space=smem, size = 0x4, offset = 0x4, fixed_abs, tag = 'smem constant byte address 0x4 - core index']
  #allocation1 [shape = 'u32[144,128]{1,0:T(1,128)}', space=vmem, size = 0x12000, scoped, tag = 'internal scratch']
  #allocation2 [shape = 'f32[8,32]{1,0:T(8,128)}', space=vmem, size = 0x1000, scoped, tag = 'scratch operand']
  %s0 = inlined_call_operand.vmem [shape: f32[2,8,32], index: 0, kind: input, shape index: {}]
  %s1 = inlined_call_operand.vmem [shape: f32[4,32,24], index: 1, kind: input, shape index: {}]
  %s2 = inlined_call_operand.vmem [shape: f32[4,1,24], index: 2, kind: input, shape index: {}]
  %s3 = inlined_call_operand.vmem [shape: f32[4,8,32], index: 3, kind: input, shape index: {}]
  %s4 = inlined_call_operand.vmem [shape: f32[1,32], index: 4, kind: input, shape index: {}]
  %s5 = inlined_call_operand.hbm [shape: f32[2,8,32], index: 5, kind: output, shape index: {}]
  %s6 = sld [smem:[#allocation0]]
  $region61: #{tpu_custom_call.1} parent=0
    _
  %s8 = ssub.s32 1, %s6
  %s9 = scalar_select 0, %s8, %s6
  $region1: #{tpu_custom_call.1} parent=0
    #allocation3 [shape = 'u8[8192]{0}', space=vmem, size = 0x2000, scoped, tag = 'output window, operand 0']
    #allocation4 [shape = 's32[2]{0}', space=sflag, size = 0x8, scoped, tag = 'scoped memory for tpu_custom_call.1']
    %10 = vsyncpa [#allocation4], 0
    %s11 = scalar_lea.sflag [#allocation4], 1
    %12 = vsyncpa %s11, 0
    loop: start=0, step=1, limit=10
    $region2: #{tpu_custom_call.1} parent=1 // loop_pre_header
      _
    $region3: #{tpu_custom_call.1} parent=1 // loop_header
      %s14 = sphi 0, %s18
      %p15 = scmp.ge.s32.totalorder %s14, 10
      %s21 = sphi 0, %s40
      %s22 = sphi 0, %s36
      %s23 = sphi 0, %s32
      %s24 = sphi 0, %s21
      %s25 = sphi 0, %s22
      %s26 = sphi 0, %s23
      %s27 = sphi 0, %s24
      %s28 = sphi 0, %s25
      %s29 = sphi 0, %s26
      %s43 = sphi 0, %s45
      %s46 = sphi 0, %s43
      %s47 = sphi 0, %s46
      %s63 = sphi 0, %s47
      %s69 = sphi 0, %s71
      %s72 = sphi 0, %s69
      %s73 = sphi 0, %s72
      %s89 = sphi 0, %s73
      %s95 = sphi 0, %s97
      %s98 = sphi 0, %s95
      %s99 = sphi 0, %s98
      %s115 = sphi 0, %s99
      %s121 = sphi 0, %s123
      %s124 = sphi 0, %s121
      %s125 = sphi 0, %s124
      %s141 = sphi 0, %s125
      %s145 = sphi 0, %s145
      %s147 = sphi 0, %s145
      %s148 = sphi 0, %s147
      %s162 = sphi 0, %s148
      %s170 = sphi 0, %s172
      %s173 = sphi 0, %s170
      %s174 = sphi 0, %s173
      %s190 = sphi 0, %s174
    $region4: #{tpu_custom_call.1} parent=1 // loop_header_branch
      %17 = sbr.rel (%p15) target = $region8
    $region5: #{tpu_custom_call.1} parent=1 // loop_body
      %s19 = ssub.s32 %s14, 1
      %s20 = ssub.s32 %s14, 2
      %s30 = sadd.s32 1, %s23
      %p31 = scmp.ge.s32.totalorder %s30, 4
      %s32 = scalar_select %p31, 0, %s30
      %s33 = sadd.s32 1, %s22
      %s34 = scalar_select %p31, %s33, %s22
      %p35 = scmp.ge.s32.totalorder %s34, 1
      %s36 = scalar_select %p35, 0, %s34
      %s37 = sadd.s32 1, %s21
      %s38 = scalar_select %p35, %s37, %s21
      %p39 = scmp.ge.s32.totalorder %s38, 2
      %s40 = scalar_select %p39, 0, %s38
      %s41 = ssub.s32 %s21, %s40
      %p42 = scmp.eq.s32.totalorder %s41, 0
      %s44 = sadd.s32 %s43, 1
      %s45 = scalar_select %p42, %s43, %s44
      %p48 = pneg %p42
      %p49 = scmp.eq.s32.totalorder %s14, 7
      %p50 = por %p48, %p49
      %p51 = scmp.ne.s32.totalorder %s43, %s46
      %p52 = scmp.eq.s32.totalorder %s14, 0
      %p53 = por %p51, %p52
      %p54 = scmp.ne.s32.totalorder %s43, %s46
      %p55 = scmp.eq.s32.totalorder %s19, 7
      %p56 = por %p54, %p55
      %p57 = scmp.ne.s32.totalorder %s46, %s47
      %p58 = scmp.eq.s32.totalorder %s19, 0
      %p59 = por %p57, %p58
      %p60 = scmp.ne.s32.totalorder %s46, %s47
      %p61 = scmp.eq.s32.totalorder %s20, 7
      %p62 = por %p60, %p61
      %p64 = scmp.ne.s32.totalorder %s47, %s63
      %p65 = scmp.eq.s32.totalorder %s20, 0
      %p66 = por %p64, %p65
      %s67 = ssub.s32 %s23, %s32
      %p68 = scmp.eq.s32.totalorder %s67, 0
      %s70 = sadd.s32 %s69, 1
      %s71 = scalar_select %p68, %s69, %s70
      %p74 = pneg %p68
      %p75 = scmp.eq.s32.totalorder %s14, 7
      %p76 = por %p74, %p75
      %p77 = scmp.ne.s32.totalorder %s69, %s72
      %p78 = scmp.eq.s32.totalorder %s14, 0
      %p79 = por %p77, %p78
      %p80 = scmp.ne.s32.totalorder %s69, %s72
      %p81 = scmp.eq.s32.totalorder %s19, 7
      %p82 = por %p80, %p81
      %p83 = scmp.ne.s32.totalorder %s72, %s73
      %p84 = scmp.eq.s32.totalorder %s19, 0
      %p85 = por %p83, %p84
      %p86 = scmp.ne.s32.totalorder %s72, %s73
      %p87 = scmp.eq.s32.totalorder %s20, 7
      %p88 = por %p86, %p87
      %p90 = scmp.ne.s32.totalorder %s73, %s89
      %p91 = scmp.eq.s32.totalorder %s20, 0
      %p92 = por %p90, %p91
      %s93 = ssub.s32 %s23, %s32
      %p94 = scmp.eq.s32.totalorder %s93, 0
      %s96 = sadd.s32 %s95, 1
      %s97 = scalar_select %p94, %s95, %s96
      %p100 = pneg %p94
      %p101 = scmp.eq.s32.totalorder %s14, 7
      %p102 = por %p100, %p101
      %p103 = scmp.ne.s32.totalorder %s95, %s98
      %p104 = scmp.eq.s32.totalorder %s14, 0
      %p105 = por %p103, %p104
      %p106 = scmp.ne.s32.totalorder %s95, %s98
      %p107 = scmp.eq.s32.totalorder %s19, 7
      %p108 = por %p106, %p107
      %p109 = scmp.ne.s32.totalorder %s98, %s99
      %p110 = scmp.eq.s32.totalorder %s19, 0
      %p111 = por %p109, %p110
      %p112 = scmp.ne.s32.totalorder %s98, %s99
      %p113 = scmp.eq.s32.totalorder %s20, 7
      %p114 = por %p112, %p113
      %p116 = scmp.ne.s32.totalorder %s99, %s115
      %p117 = scmp.eq.s32.totalorder %s20, 0
      %p118 = por %p116, %p117
      %s119 = ssub.s32 %s23, %s32
      %p120 = scmp.eq.s32.totalorder %s119, 0
      %s122 = sadd.s32 %s121, 1
      %s123 = scalar_select %p120, %s121, %s122
      %p126 = pneg %p120
      %p127 = scmp.eq.s32.totalorder %s14, 7
      %p128 = por %p126, %p127
      %p129 = scmp.ne.s32.totalorder %s121, %s124
      %p130 = scmp.eq.s32.totalorder %s14, 0
      %p131 = por %p129, %p130
      %p132 = scmp.ne.s32.totalorder %s121, %s124
      %p133 = scmp.eq.s32.totalorder %s19, 7
      %p134 = por %p132, %p133
      %p135 = scmp.ne.s32.totalorder %s124, %s125
      %p136 = scmp.eq.s32.totalorder %s19, 0
      %p137 = por %p135, %p136
      %p138 = scmp.ne.s32.totalorder %s124, %s125
      %p139 = scmp.eq.s32.totalorder %s20, 7
      %p140 = por %p138, %p139
      %p142 = scmp.ne.s32.totalorder %s125, %s141
      %p143 = scmp.eq.s32.totalorder %s20, 0
      %p144 = por %p142, %p143
      %s146 = sadd.s32 %s145, 1
      %p149 = scmp.eq.s32.totalorder %s14, 7
      %p150 = scmp.ne.s32.totalorder %s145, %s147
      %p151 = scmp.eq.s32.totalorder %s14, 0
      %p152 = por %p150, %p151
      %p153 = scmp.ne.s32.totalorder %s145, %s147
      %p154 = scmp.eq.s32.totalorder %s19, 7
      %p155 = por %p153, %p154
      %p156 = scmp.ne.s32.totalorder %s147, %s148
      %p157 = scmp.eq.s32.totalorder %s19, 0
      %p158 = por %p156, %p157
      %p159 = scmp.ne.s32.totalorder %s147, %s148
      %p160 = scmp.eq.s32.totalorder %s20, 7
      %p161 = por %p159, %p160
      %p163 = scmp.ne.s32.totalorder %s148, %s162
      %p164 = scmp.eq.s32.totalorder %s20, 0
      %p165 = por %p163, %p164
      %s166 = ssub.s32 %s21, %s40
      %s167 = ssub.s32 %s22, %s36
      %s168 = sor.u32 %s166, %s167
      %p169 = scmp.eq.s32.totalorder %s168, 0
      %s171 = sadd.s32 %s170, 1
      %s172 = scalar_select %p169, %s170, %s171
      %p175 = pneg %p169
      %p176 = scmp.eq.s32.totalorder %s14, 7
      %p177 = por %p175, %p176
      %p178 = scmp.ne.s32.totalorder %s170, %s173
      %p179 = scmp.eq.s32.totalorder %s14, 0
      %p180 = por %p178, %p179
      %p181 = scmp.ne.s32.totalorder %s170, %s173
      %p182 = scmp.eq.s32.totalorder %s19, 7
      %p183 = por %p181, %p182
      %p184 = scmp.ne.s32.totalorder %s173, %s174
      %p185 = scmp.eq.s32.totalorder %s19, 0
      %p186 = por %p184, %p185
      %p187 = scmp.ne.s32.totalorder %s173, %s174
      %p188 = scmp.eq.s32.totalorder %s20, 7
      %p189 = por %p187, %p188
      %p191 = scmp.ne.s32.totalorder %s174, %s190
      %p192 = scmp.eq.s32.totalorder %s20, 0
      %p193 = por %p191, %p192
      %p194 = scmp.le.s32.totalorder 1, %s14
      %p195 = scmp.lt.s32.totalorder %s14, 9
      %p196 = pnand %p194, %p195
      %p197 = pneg %p196
      // Predicated region
      $region9: #{tpu_custom_call.1} parent=5 // pred_check
        _
      $region10: #{tpu_custom_call.1} parent=5 // pred_check_branch
        %199 = sbr.rel (%p196) target = $region12
      $region11: #{tpu_custom_call.1} parent=5 // pred_region
        %s200 = ssub.s32 %s14, 1
        // Predicated region
        $region13: #{tpu_custom_call.1} parent=11 // pred_check
          %p201 = pneg %p158
        $region14: #{tpu_custom_call.1} parent=11 // pred_check_branch
          %203 = sbr.rel (%p201) target = $region16
        $region15: #{tpu_custom_call.1} parent=11 // pred_region
          _
        $region16: #{tpu_custom_call.1} parent=11 // pred_fallthru
          _
      $region12: #{tpu_custom_call.1} parent=5 // pred_fallthru
        _
      %p204 = scmp.lt.s32.totalorder %s14, 8
      // Predicated region
      $region17: #{tpu_custom_call.1} parent=5 // pred_check
        %p205 = pneg %p204
      $region18: #{tpu_custom_call.1} parent=5 // pred_check_branch
        %207 = sbr.rel (%p205) target = $region20
      $region19: #{tpu_custom_call.1} parent=5 // pred_region
        // Predicated region
        $region21: #{tpu_custom_call.1} parent=19 // pred_check
          %p208 = pneg %p53
        $region22: #{tpu_custom_call.1} parent=19 // pred_check_branch
          %210 = sbr.rel (%p208) target = $region24
        $region23: #{tpu_custom_call.1} parent=19 // pred_region
          %p211 = scmp.lt.s32.totalorder %s21, 1
          %s212 = scalar_select %p211, %s21, 1
          %s213 = smul.addr %s212, 8
          %s214 = scalar_lea.vmem %s0, %s213
        $region24: #{tpu_custom_call.1} parent=19 // pred_fallthru
          _
        // Predicated region
        $region25: #{tpu_custom_call.1} parent=19 // pred_check
          %p215 = pneg %p79
        $region26: #{tpu_custom_call.1} parent=19 // pred_check_branch
          %217 = sbr.rel (%p215) target = $region28
        $region27: #{tpu_custom_call.1} parent=19 // pred_region
          %p218 = scmp.lt.s32.totalorder %s23, 3
          %s219 = scalar_select %p218, %s23, 3
          %s220 = smul.addr %s219, 4
          %s221 = smul.addr %s220, 8
          %s222 = scalar_lea.vmem %s1, %s221
        $region28: #{tpu_custom_call.1} parent=19 // pred_fallthru
          _
        // Predicated region
        $region29: #{tpu_custom_call.1} parent=19 // pred_check
          %p223 = pneg %p105
        $region30: #{tpu_custom_call.1} parent=19 // pred_check_branch
          %225 = sbr.rel (%p223) target = $region32
        $region31: #{tpu_custom_call.1} parent=19 // pred_region
          %p226 = scmp.lt.s32.totalorder %s23, 3
          %s227 = scalar_select %p226, %s23, 3
          %s228 = scalar_lea.vmem %s2, %s227
        $region32: #{tpu_custom_call.1} parent=19 // pred_fallthru
          _
        // Predicated region
        $region33: #{tpu_custom_call.1} parent=19 // pred_check
          %p229 = pneg %p131
        $region34: #{tpu_custom_call.1} parent=19 // pred_check_branch
          %231 = sbr.rel (%p229) target = $region36
        $region35: #{tpu_custom_call.1} parent=19 // pred_region
          %p232 = scmp.lt.s32.totalorder %s23, 3
          %s233 = scalar_select %p232, %s23, 3
          %s234 = smul.addr %s233, 8
          %s235 = scalar_lea.vmem %s3, %s234
        $region36: #{tpu_custom_call.1} parent=19 // pred_fallthru
          _
      $region20: #{tpu_custom_call.1} parent=5 // pred_fallthru
        _
      %p236 = scmp.le.s32.totalorder 1, %s14
      %p237 = scmp.lt.s32.totalorder %s14, 9
      %p238 = pnand %p236, %p237
      %p239 = pneg %p238
      // Predicated region
      $region37: #{tpu_custom_call.1} parent=5 // pred_check
        _
      $region38: #{tpu_custom_call.1} parent=5 // pred_check_branch
        %241 = sbr.rel (%p238) target = $region40
      $region39: #{tpu_custom_call.1} parent=5 // pred_region
        %s242 = ssub.s32 %s14, 1
        %p243 = scmp.lt.s32.totalorder %s24, 1
        %s244 = scalar_select %p243, %s24, 1
        %s245 = smul.addr %s244, 8
        %s246 = scalar_lea.vmem %s0, %s245
        %p247 = pneg %p59
        %p248 = pneg %p56
        %p249 = scmp.lt.s32.totalorder %s26, 3
        %s250 = scalar_select %p249, %s26, 3
        %s251 = smul.addr %s250, 4
        %s252 = smul.addr %s251, 8
        %s253 = scalar_lea.vmem %s1, %s252
        %p254 = pneg %p85
        %p255 = pneg %p82
        %p256 = scmp.lt.s32.totalorder %s26, 3
        %s257 = scalar_select %p256, %s26, 3
        %s258 = scalar_lea.vmem %s2, %s257
        %p259 = pneg %p111
        %p260 = pneg %p108
        %p261 = scmp.lt.s32.totalorder %s26, 3
        %s262 = scalar_select %p261, %s26, 3
        %s263 = smul.addr %s262, 8
        %s264 = scalar_lea.vmem %s3, %s263
        %p265 = pneg %p137
        %p266 = pneg %p134
        %p267 = pneg %p158
        %p268 = pneg %p155
        %p269 = pneg %p186
        %p270 = pneg %p183
        %s271 = sand.u32 %s173, 1
        %s272 = scalar_lea.sflag [#allocation4], %s271
        %s273 = sand.u32 %s173, 1
        %s274 = smul.addr %s273, 8
        %s275 = scalar_lea.vmem [#allocation3], %s274
        %p276 = scmp.lt.s32.totalorder %s24, 1
        %s277 = scalar_select %p276, %s24, 1
        %s278 = smul.addr %s277, 8
        %s279 = scalar_lea.vmem %s0, %s278
        %p280 = scmp.lt.s32.totalorder %s26, 3
        %s281 = scalar_select %p280, %s26, 3
        %s282 = smul.addr %s281, 4
        %s283 = smul.addr %s282, 8
        %s284 = scalar_lea.vmem %s1, %s283
        %p285 = scmp.lt.s32.totalorder %s26, 3
        %s286 = scalar_select %p285, %s26, 3
        %s287 = scalar_lea.vmem %s2, %s286
        %p288 = scmp.lt.s32.totalorder %s26, 3
        %s289 = scalar_select %p288, %s26, 3
        %s290 = smul.addr %s289, 8
        %s291 = scalar_lea.vmem %s3, %s290
        %v292 = vld [vmem:[%s279] sm:$0xff]
        %v293 = vld [vmem:[%s284] sm:$0xff]
        %v294 = vld [vmem:[%s284 + $0x8] sm:$0xff]
        %v295 = vld [vmem:[%s284 + $0x10] sm:$0xff]
        %v296 = vld [vmem:[%s284 + $0x18] sm:$0xff]
        %v297 = vld [vmem:[%s287] sm:$0x1]
        %v299 = vlaneseq
        %v300 = vshrl.u32 %v299, 7
        %v301 = vsub.s32 0, %v300
        %v302 = vrot.slane %v297, %v301
        %vm304 = vcmask 261120
        %v306 = vsel %vm304, %v292, 0
        %308 = vmatprep.subr.mxu0 0.0
        %309 = vmatpush1.msra.mxu0 %v293
        %310 = vmatprep.subr.mxu0 0.0
        %311 = vmatpush1.msra.mxu0 %v294
        %312 = vmatprep.subr.mxu0 0.0
        %313 = vmatpush1.msra.mxu0 %v295
        %314 = vmatprep.subr.mxu0 0.0
        %315 = vmatpush1.msra.mxu0 %v296
        %316 = vmatprep.subr.mxu0 0.0
        %317 = vmatpush1.msra.mxu0 0.0
        %318 = vmatprep.subr.mxu0 0.0
        %319 = vmatpush1.msra.mxu0 0.0
        %320 = vmatprep.subr.mxu0 0.0
        %321 = vmatpush1.msra.mxu0 0.0
        %322 = vmatprep.subr.mxu0 0.0
        %323 = vmatpush1.msra.mxu0 0.0
        %324 = vmatprep.subr.mxu0 0.0
        %325 = vmatpush1.msra.mxu0 0.0
        %326 = vmatprep.subr.mxu0 0.0
        %327 = vmatpush1.msra.mxu0 0.0
        %328 = vmatprep.subr.mxu0 0.0
        %329 = vmatpush1.msra.mxu0 0.0
        %330 = vmatprep.subr.mxu0 0.0
        %331 = vmatpush1.msra.mxu0 0.0
        %332 = vmatprep.subr.mxu0 0.0
        %333 = vmatpush1.msra.mxu0 0.0
        %334 = vmatprep.subr.mxu0 0.0
        %335 = vmatpush1.msra.mxu0 0.0
        %336 = vmatprep.subr.mxu0 0.0
        %337 = vmatpush1.msra.mxu0 0.0
        %338 = vmatprep.subr.mxu0 0.0
        %339 = vmatpush1.msra.mxu0 0.0
        %340 = vmatprep.subr.mxu0 0.0
        %341 = vmatpush1.msra.mxu0 0.0
        %342 = vmatprep.subr.mxu0 0.0
        %343 = vmatpush1.msra.mxu0 0.0
        %344 = vmatprep.subr.mxu0 0.0
        %345 = vmatpush1.msra.mxu0 0.0
        %346 = vmatprep.subr.mxu0 0.0
        %347 = vmatpush1.msra.mxu0 0.0
        %348 = vmatprep.subr.mxu0 0.0
        %349 = vmatpush1.msra.mxu0 0.0
        %350 = vmatprep.subr.mxu0 0.0
        %351 = vmatpush1.msra.mxu0 0.0
        %352 = vmatprep.subr.mxu0 0.0
        %353 = vmatpush1.msra.mxu0 0.0
        %354 = vmatprep.subr.mxu0 0.0
        %355 = vmatpush1.msra.mxu0 0.0
        %356 = vmatprep.subr.mxu0 0.0
        %357 = vmatpush1.msra.mxu0 0.0
        %358 = vmatprep.subr.mxu0 0.0
        %359 = vmatpush1.msra.mxu0 0.0
        %360 = vmatprep.subr.mxu0 0.0
        %361 = vmatpush1.msra.mxu0 0.0
        %362 = vmatprep.subr.mxu0 0.0
        %363 = vmatpush1.msra.mxu0 0.0
        %364 = vmatprep.subr.mxu0 0.0
        %365 = vmatpush1.msra.mxu0 0.0
        %366 = vmatprep.subr.mxu0 0.0
        %367 = vmatpush1.msra.mxu0 0.0
        %368 = vmatprep.subr.mxu0 0.0
        %369 = vmatpush1.msra.mxu0 0.0
        %370 = vmatprep.subr.mxu0 0.0
        %371 = vmatpush1.msra.mxu0 0.0
        %372 = vmatprep.mubr.f32.mxu0 0.0
        %373 = vmatmul.mubr.f32.gmra.mrb[0].mxu0 %v306
        %v374 = vpop.f32.mrb[0].mxu0
        %v375 = vadd.f32 %v302, %v374
        %v376 = vpop.f32.mrb[0].mxu0
        %377 = vdwg.mxu0
        %379 = vrot.lane.b32.xlu0 %v375, 120
        %v380 = vpop.permute.xlu0 %379
        %vm381 = vcmask 64512
        %v382 = vsel %vm381, %v375, 0
        %v384 = vsel %vm381, %v380, 0
        %386 = vmatprep.subr.mxu0 0.0
        %387 = vmatpush1.xpose.msra.mxu0 %v384
        %388 = vmatprep.subr.mxu0 0.0
        %389 = vmatpush1.xpose.msra.mxu0 0.0
        %390 = vmatprep.subr.mxu0 0.0
        %391 = vmatpush1.xpose.msra.mxu0 0.0
        %392 = vmatprep.subr.mxu0 0.0
        %393 = vmatpush1.xpose.msra.mxu0 0.0
        %394 = vmatprep.subr.mxu0 0.0
        %395 = vmatpush1.xpose.msra.mxu0 0.0
        %396 = vmatprep.subr.mxu0 0.0
        %397 = vmatpush1.xpose.msra.mxu0 0.0
        %398 = vmatprep.subr.mxu0 0.0
        %399 = vmatpush1.xpose.msra.mxu0 0.0
        %400 = vmatprep.subr.mxu0 0.0
        %401 = vmatpush1.xpose.msra.mxu0 0.0
        %402 = vmatprep.subr.mxu0 0.0
        %403 = vmatpush1.xpose.msra.mxu0 0.0
        %404 = vmatprep.subr.mxu0 0.0
        %405 = vmatpush1.xpose.msra.mxu0 0.0
        %406 = vmatprep.subr.mxu0 0.0
        %407 = vmatpush1.xpose.msra.mxu0 0.0
        %408 = vmatprep.subr.mxu0 0.0
        %409 = vmatpush1.xpose.msra.mxu0 0.0
        %410 = vmatprep.subr.mxu0 0.0
        %411 = vmatpush1.xpose.msra.mxu0 0.0
        %412 = vmatprep.subr.mxu0 0.0
        %413 = vmatpush1.xpose.msra.mxu0 0.0
        %414 = vmatprep.subr.mxu0 0.0
        %415 = vmatpush1.xpose.msra.mxu0 0.0
        %416 = vmatprep.subr.mxu0 0.0
        %417 = vmatpush1.xpose.msra.mxu0 0.0
        %418 = vmatprep.subr.mxu0 0.0
        %419 = vmatpush1.xpose.msra.mxu0 0.0
        %420 = vmatprep.subr.mxu0 0.0
        %421 = vmatpush1.xpose.msra.mxu0 0.0
        %422 = vmatprep.subr.mxu0 0.0
        %423 = vmatpush1.xpose.msra.mxu0 0.0
        %424 = vmatprep.subr.mxu0 0.0
        %425 = vmatpush1.xpose.msra.mxu0 0.0
        %426 = vmatprep.subr.mxu0 0.0
        %427 = vmatpush1.xpose.msra.mxu0 0.0
        %428 = vmatprep.subr.mxu0 0.0
        %429 = vmatpush1.xpose.msra.mxu0 0.0
        %430 = vmatprep.subr.mxu0 0.0
        %431 = vmatpush1.xpose.msra.mxu0 0.0
        %432 = vmatprep.subr.mxu0 0.0
        %433 = vmatpush1.xpose.msra.mxu0 0.0
        %434 = vmatprep.subr.mxu0 0.0
        %435 = vmatpush1.xpose.msra.mxu0 0.0
        %436 = vmatprep.subr.mxu0 0.0
        %437 = vmatpush1.xpose.msra.mxu0 0.0
        %438 = vmatprep.subr.mxu0 0.0
        %439 = vmatpush1.xpose.msra.mxu0 0.0
        %440 = vmatprep.subr.mxu0 0.0
        %441 = vmatpush1.xpose.msra.mxu0 0.0
        %442 = vmatprep.subr.mxu0 0.0
        %443 = vmatpush1.xpose.msra.mxu0 0.0
        %444 = vmatprep.subr.mxu0 0.0
        %445 = vmatpush1.xpose.msra.mxu0 0.0
        %446 = vmatprep.subr.mxu0 0.0
        %447 = vmatpush1.xpose.msra.mxu0 0.0
        %448 = vmatprep.subr.mxu0 0.0
        %449 = vmatpush1.xpose.msra.mxu0 0.0
        %450 = vmatprep.mubr.f32.mxu0 0.0
        %451 = vmatmul.mubr.f32.gmra.mrb[0].mxu0 %v382
        %v452 = vpop.f32.mrb[0].mxu0
        %v453 = vadd.f32 0.0, %v452
        %v454 = vpop.f32.mrb[0].mxu0
        %455 = vdwg.mxu0
        %v456 = vsel %vm381, %v453, -inf
        %457 = vmax.xlane.f32.xlu0 %v456
        %v458 = vpop.xlane.xlu0 %457
        %v459 = vsub.f32 %v453, %v458
        %v460 = vmul.f32 %v459, 1.442695
        %v461 = vpow.pop %v460
        %v462 = vsel %vm381, %v461, 0.0
        %463 = vadd.xlane.f32.xlu0 %v462
        %v464 = vpop.xlane.xlu0 %463
        %v465 = vrcp.pop %v464
        %v466 = vmul.f32 %v461, %v465
        %467 = vrot.lane.b32.xlu0 %v375, 112
        %v468 = vpop.permute.xlu0 %467
        %v471 = vsel %vm381, %v466, 0
        %473 = vmatprep.subr.mxu0 0.0
        %474 = vmatpush1.msra.mxu0 %v468
        %475 = vmatprep.subr.mxu0 0.0
        %476 = vmatpush1.msra.mxu0 0.0
        %477 = vmatprep.subr.mxu0 0.0
        %478 = vmatpush1.msra.mxu0 0.0
        %479 = vmatprep.subr.mxu0 0.0
        %480 = vmatpush1.msra.mxu0 0.0
        %481 = vmatprep.subr.mxu0 0.0
        %482 = vmatpush1.msra.mxu0 0.0
        %483 = vmatprep.subr.mxu0 0.0
        %484 = vmatpush1.msra.mxu0 0.0
        %485 = vmatprep.subr.mxu0 0.0
        %486 = vmatpush1.msra.mxu0 0.0
        %487 = vmatprep.subr.mxu0 0.0
        %488 = vmatpush1.msra.mxu0 0.0
        %489 = vmatprep.subr.mxu0 0.0
        %490 = vmatpush1.msra.mxu0 0.0
        %491 = vmatprep.subr.mxu0 0.0
        %492 = vmatpush1.msra.mxu0 0.0
        %493 = vmatprep.subr.mxu0 0.0
        %494 = vmatpush1.msra.mxu0 0.0
        %495 = vmatprep.subr.mxu0 0.0
        %496 = vmatpush1.msra.mxu0 0.0
        %497 = vmatprep.subr.mxu0 0.0
        %498 = vmatpush1.msra.mxu0 0.0
        %499 = vmatprep.subr.mxu0 0.0
        %500 = vmatpush1.msra.mxu0 0.0
        %501 = vmatprep.subr.mxu0 0.0
        %502 = vmatpush1.msra.mxu0 0.0
        %503 = vmatprep.subr.mxu0 0.0
        %504 = vmatpush1.msra.mxu0 0.0
        %505 = vmatprep.subr.mxu0 0.0
        %506 = vmatpush1.msra.mxu0 0.0
        %507 = vmatprep.subr.mxu0 0.0
        %508 = vmatpush1.msra.mxu0 0.0
        %509 = vmatprep.subr.mxu0 0.0
        %510 = vmatpush1.msra.mxu0 0.0
        %511 = vmatprep.subr.mxu0 0.0
        %512 = vmatpush1.msra.mxu0 0.0
        %513 = vmatprep.subr.mxu0 0.0
        %514 = vmatpush1.msra.mxu0 0.0
        %515 = vmatprep.subr.mxu0 0.0
        %516 = vmatpush1.msra.mxu0 0.0
        %517 = vmatprep.subr.mxu0 0.0
        %518 = vmatpush1.msra.mxu0 0.0
        %519 = vmatprep.subr.mxu0 0.0
        %520 = vmatpush1.msra.mxu0 0.0
        %521 = vmatprep.subr.mxu0 0.0
        %522 = vmatpush1.msra.mxu0 0.0
        %523 = vmatprep.subr.mxu0 0.0
        %524 = vmatpush1.msra.mxu0 0.0
        %525 = vmatprep.subr.mxu0 0.0
        %526 = vmatpush1.msra.mxu0 0.0
        %527 = vmatprep.subr.mxu0 0.0
        %528 = vmatpush1.msra.mxu0 0.0
        %529 = vmatprep.subr.mxu0 0.0
        %530 = vmatpush1.msra.mxu0 0.0
        %531 = vmatprep.subr.mxu0 0.0
        %532 = vmatpush1.msra.mxu0 0.0
        %533 = vmatprep.subr.mxu0 0.0
        %534 = vmatpush1.msra.mxu0 0.0
        %535 = vmatprep.subr.mxu0 0.0
        %536 = vmatpush1.msra.mxu0 0.0
        %537 = vmatprep.mubr.f32.mxu0 0.0
        %538 = vmatmul.mubr.f32.gmra.mrb[0].mxu0 %v471
        %v539 = vpop.f32.mrb[0].mxu0
        %v540 = vadd.f32 0.0, %v539
        %v541 = vpop.f32.mrb[0].mxu0
        %542 = vdwg.mxu0
        %p543 = scmp.eq.s32.totalorder %s26, 0
        // Predicated region
        $region41: #{tpu_custom_call.1} parent=39 // pred_check
          %p544 = pneg %p543
        $region42: #{tpu_custom_call.1} parent=39 // pred_check_branch
          %546 = sbr.rel (%p544) target = $region44
        $region43: #{tpu_custom_call.1} parent=39 // pred_region
          %v547 = vld [vmem:[%s4] sm:$0x1]
          %v549 = vlaneseq
          %v550 = vshrl.u32 %v549, 7
          %v551 = vsub.s32 0, %v550
          %v552 = vrot.slane %v547, %v551
          %554 = vst.msk [vmem:[#allocation2] sm:$0xff] %vm304, %v552
        $region44: #{tpu_custom_call.1} parent=39 // pred_fallthru
          _
        %v555 = vld [vmem:[#allocation2] sm:$0xff]
        %v556 = vld [vmem:[%s291] sm:$0xff]
        %v558 = vsel %vm381, %v540, 0
        %560 = vmatprep.subr.mxu0 0.0
        %561 = vmatpush1.msra.mxu0 %v556
        %562 = vmatprep.subr.mxu0 0.0
        %563 = vmatpush1.msra.mxu0 0.0
        %564 = vmatprep.subr.mxu0 0.0
        %565 = vmatpush1.msra.mxu0 0.0
        %566 = vmatprep.subr.mxu0 0.0
        %567 = vmatpush1.msra.mxu0 0.0
        %568 = vmatprep.subr.mxu0 0.0
        %569 = vmatpush1.msra.mxu0 0.0
        %570 = vmatprep.subr.mxu0 0.0
        %571 = vmatpush1.msra.mxu0 0.0
        %572 = vmatprep.subr.mxu0 0.0
        %573 = vmatpush1.msra.mxu0 0.0
        %574 = vmatprep.subr.mxu0 0.0
        %575 = vmatpush1.msra.mxu0 0.0
        %576 = vmatprep.subr.mxu0 0.0
        %577 = vmatpush1.msra.mxu0 0.0
        %578 = vmatprep.subr.mxu0 0.0
        %579 = vmatpush1.msra.mxu0 0.0
        %580 = vmatprep.subr.mxu0 0.0
        %581 = vmatpush1.msra.mxu0 0.0
        %582 = vmatprep.subr.mxu0 0.0
        %583 = vmatpush1.msra.mxu0 0.0
        %584 = vmatprep.subr.mxu0 0.0
        %585 = vmatpush1.msra.mxu0 0.0
        %586 = vmatprep.subr.mxu0 0.0
        %587 = vmatpush1.msra.mxu0 0.0
        %588 = vmatprep.subr.mxu0 0.0
        %589 = vmatpush1.msra.mxu0 0.0
        %590 = vmatprep.subr.mxu0 0.0
        %591 = vmatpush1.msra.mxu0 0.0
        %592 = vmatprep.subr.mxu0 0.0
        %593 = vmatpush1.msra.mxu0 0.0
        %594 = vmatprep.subr.mxu0 0.0
        %595 = vmatpush1.msra.mxu0 0.0
        %596 = vmatprep.subr.mxu0 0.0
        %597 = vmatpush1.msra.mxu0 0.0
        %598 = vmatprep.subr.mxu0 0.0
        %599 = vmatpush1.msra.mxu0 0.0
        %600 = vmatprep.subr.mxu0 0.0
        %601 = vmatpush1.msra.mxu0 0.0
        %602 = vmatprep.subr.mxu0 0.0
        %603 = vmatpush1.msra.mxu0 0.0
        %604 = vmatprep.subr.mxu0 0.0
        %605 = vmatpush1.msra.mxu0 0.0
        %606 = vmatprep.subr.mxu0 0.0
        %607 = vmatpush1.msra.mxu0 0.0
        %608 = vmatprep.subr.mxu0 0.0
        %609 = vmatpush1.msra.mxu0 0.0
        %610 = vmatprep.subr.mxu0 0.0
        %611 = vmatpush1.msra.mxu0 0.0
        %612 = vmatprep.subr.mxu0 0.0
        %613 = vmatpush1.msra.mxu0 0.0
        %614 = vmatprep.subr.mxu0 0.0
        %615 = vmatpush1.msra.mxu0 0.0
        %616 = vmatprep.subr.mxu0 0.0
        %617 = vmatpush1.msra.mxu0 0.0
        %618 = vmatprep.subr.mxu0 0.0
        %619 = vmatpush1.msra.mxu0 0.0
        %620 = vmatprep.subr.mxu0 0.0
        %621 = vmatpush1.msra.mxu0 0.0
        %622 = vmatprep.subr.mxu0 0.0
        %623 = vmatpush1.msra.mxu0 0.0
        %624 = vmatprep.mubr.f32.mxu0 0.0
        %625 = vmatmul.mubr.f32.gmra.mrb[0].mxu0 %v558
        %v626 = vpop.f32.mrb[0].mxu0
        %v627 = vadd.f32 0.0, %v626
        %v628 = vpop.f32.mrb[0].mxu0
        %629 = vdwg.mxu0
        %v630 = vadd.f32 %v555, %v627
        %631 = vst.msk [vmem:[#allocation2] sm:$0xff] %vm304, %v630
        %p632 = scmp.eq.s32.totalorder %s26, 3
        // Predicated region
        $region45: #{tpu_custom_call.1} parent=39 // pred_check
          %p633 = pneg %p632
        $region46: #{tpu_custom_call.1} parent=39 // pred_check_branch
          %635 = sbr.rel (%p633) target = $region48
        $region47: #{tpu_custom_call.1} parent=39 // pred_region
          %v636 = vld [vmem:[#allocation2] sm:$0xff]
          %637 = vst.msk [vmem:[%s275] sm:$0xff] %vm304, %v636
        $region48: #{tpu_custom_call.1} parent=39 // pred_fallthru
          _
        %s638 = sand.u32 %s173, 1
        %s639 = scalar_lea.sflag [#allocation4], %s638
        %s640 = sand.u32 %s173, 1
        %s641 = smul.addr %s640, 8
        %s642 = scalar_lea.vmem [#allocation3], %s641
        // Predicated region
        $region49: #{tpu_custom_call.1} parent=39 // pred_check
          %p643 = pneg %p183
        $region50: #{tpu_custom_call.1} parent=39 // pred_check_branch
          %645 = sbr.rel (%p643) target = $region52
        $region51: #{tpu_custom_call.1} parent=39 // pred_region
          %s647 = ssub.s32 128, 128
          %648 = vsyncadd %s639, %s647
          %s649 = sadd.s32 %s25, %s24
          %s650 = smul.addr %s649, 128
          %s651 = scalar_lea.hbm %s5, %s650
          %s653 = sshll.u32 %s642, 4
          %s654 = int_to_ptr.vmem [resolvable:$true] %s653
          %656 = dma.vmem_to_hbm [thread:$0]  %s654, 128, %s651, %s639
        $region52: #{tpu_custom_call.1} parent=39 // pred_fallthru
          _
      $region40: #{tpu_custom_call.1} parent=5 // pred_fallthru
        _
      %p657 = scmp.le.s32.totalorder 2, %s14
      // Predicated region
      $region53: #{tpu_custom_call.1} parent=5 // pred_check
        %p658 = pneg %p657
      $region54: #{tpu_custom_call.1} parent=5 // pred_check_branch
        %660 = sbr.rel (%p658) target = $region56
      $region55: #{tpu_custom_call.1} parent=5 // pred_region
        %s661 = ssub.s32 %s14, 2
        // Predicated region
        $region57: #{tpu_custom_call.1} parent=55 // pred_check
          %p662 = pneg %p189
        $region58: #{tpu_custom_call.1} parent=55 // pred_check_branch
          %664 = sbr.rel (%p662) target = $region60
        $region59: #{tpu_custom_call.1} parent=55 // pred_region
          %s665 = sand.u32 %s174, 1
          %s666 = scalar_lea.sflag [#allocation4], %s665
          %s667 = sand.u32 %s174, 1
          %s668 = smul.addr %s667, 8
          %s669 = scalar_lea.vmem [#allocation3], %s668
          %670 = dma.done %s666, 128
        $region60: #{tpu_custom_call.1} parent=55 // pred_fallthru
          _
      $region56: #{tpu_custom_call.1} parent=5 // pred_fallthru
        _
    $region6: #{tpu_custom_call.1} parent=1 // loop_footer
      %s18 = sadd.s32 1, %s14
    $region7: #{tpu_custom_call.1} parent=1 // loop_footer_branch
      %13 = sbr.rel target = $region3
    $region8: #{tpu_custom_call.1} parent=1 // loop_exit
      _
    %671 = vsyncpa [#allocation4], 1
    %s672 = scalar_lea.sflag [#allocation4], 1
    %673 = vsyncpa %s672, 1

</llo_original>
